<compile_context>
chip_gen: v7x
topology: tpu7x:2x2x1
jax: 0.10.0
libtpu: 0.0.40
codegen_flags: <defaults>
</compile_context>

<pallas_src>
import functools

import numpy as np
import jax
import jax.numpy as jnp
from jax.experimental import pallas as pl
from jax.experimental.pallas import tpu as pltpu


def nbeats_kernel(x_ref, w_ref, c_ref, out_ref):
    """Fully-folded N-BEATS forward on one M-tile.

    x_ref : (S, TM)   raw inputs, time steps on sublanes, M = B*C on lanes
    w_ref : (P, S)    folded affine weight (whole model, incl. base term)
    c_ref : (P, 1)    folded affine bias
    out   : (P, TM)
    """
    out_ref[...] = (
        jnp.dot(w_ref[...], x_ref[...], preferred_element_type=jnp.float32)
        + c_ref[...]
    )


def _choose_tile(M, tile_m):
    """Pick lane-tile size.  Single full-extent tile for tiny M; otherwise a
    multiple of 128, capped so that we get >= 2 grid steps (megacore / v7x)."""
    if M <= 512:
        return M, 1
    tm = min(tile_m, max(128, ((M + 1) // 2 // 128) * 128))
    return tm, pl.cdiv(M, tm)


@functools.partial(jax.jit, static_argnames=("tile_m",))
def nbeats_forward(x_enc, w, c, *, tile_m=8192):
    """x_enc: (B, seq_len, C) float32 -> forecast (B, pred_len, C)."""
    B, S, C = x_enc.shape
    pred = w.shape[0]
    M = B * C

    # (B, S, C) -> (S, B*C): put M on the lane axis (lane-dense stores, MXU
    # N = M).  Jitted together with the pallas_call so XLA schedules/fuses the
    # layout passes with producers/consumers.
    x2d = jnp.transpose(x_enc, (1, 0, 2)).reshape(S, M)

    tm, grid_m = _choose_tile(M, tile_m)

    # No padding: Pallas clips the ragged last block.  Correct because every
    # output column depends only on its own input column.
    fc = pl.pallas_call(
        nbeats_kernel,
        out_shape=jax.ShapeDtypeStruct((pred, M), jnp.float32),
        grid=(grid_m,),
        in_specs=[
            pl.BlockSpec((S, tm), lambda i: (0, i)),      # x tile (pipelined)
            pl.BlockSpec(w.shape, lambda i: (0, 0)),      # weights stay
            pl.BlockSpec(c.shape, lambda i: (0, 0)),      #   VMEM-resident
        ],
        out_specs=pl.BlockSpec((pred, tm), lambda i: (0, i)),
        compiler_params=pltpu.CompilerParams(
            dimension_semantics=("parallel",)),
    )(x2d, w, c)

    # (pred, B*C) -> (B, pred, C)  == forecast.permute(0, 2, 1) in Model.forward
    return jnp.transpose(fc.reshape(pred, B, C), (1, 0, 2))


def make_params(seq, pred, n_poly, n_harm, key):
    """Build raw parameters mirroring the PyTorch __init__ (n_layers=1), plus
    the host-side fully-folded affine (W, c) consumed by the kernel."""
    # --- TrendBasis templates ---
    tgrid = np.arange(seq + pred, dtype=np.float64) / (seq + pred)
    total = np.stack([np.power(tgrid, i) for i in range(n_poly + 1)]
                     ).astype(np.float32) ** 0.75
    bb1 = total[:, :seq]                              # (T1, seq)
    bf1 = total[:, seq:]                              # (T1, pred)
    H1 = 2 * (n_poly + 1)
    T1 = n_poly + 1

    # --- SeasonalityBasis templates ---
    freq = np.append(np.zeros(1, dtype=np.float32),
                     np.arange(n_harm, n_harm / 2 * (pred + seq),
                               dtype=np.float32) / n_harm)[None, :]
    tg = np.arange(seq + pred, dtype=np.float32)[:, None] / (pred + seq)
    g1 = -2 * np.pi * tg * freq
    g2 = -2 * np.pi * tg * freq - -0.25 * np.pi * freq
    bb2 = np.concatenate([np.cos(g1[:seq]).T, np.sin(g1[:seq]).T,
                          np.cos(g2[:seq]).T, np.sin(g2[:seq]).T],
                         axis=0).astype(np.float32)
    bf2 = np.concatenate([np.cos(g1[seq:]).T, np.sin(g1[seq:]).T,
                          np.cos(g2[seq:]).T, np.sin(g2[seq:]).T],
                         axis=0).astype(np.float32)
    T2 = bf2.shape[0]
    H2 = 4 * int(np.ceil(n_harm / 2 * (pred + seq)) - (n_harm - 1))
    assert H2 == T2, (H2, T2)   # holds for this config (matches PyTorch dims)

    keys = jax.random.split(key, 4)

    def linear(k, fan_in, fan_out):
        bound = 1.0 / np.sqrt(fan_in)
        kw, kb = jax.random.split(k)
        w = jax.random.uniform(kw, (fan_out, fan_in), jnp.float32, -bound, bound)
        b = jax.random.uniform(kb, (fan_out,), jnp.float32, -bound, bound)
        return np.asarray(w), np.asarray(b)

    w1a, b1a = linear(keys[0], seq, H1)   # block-1 hidden Linear
    w1b, b1b = linear(keys[1], H1, T1)    # block-1 output_layer
    w2a, b2a = linear(keys[2], seq, H2)   # block-2 hidden Linear
    w2b, b2b = linear(keys[3], H2, T2)    # block-2 output_layer

    raw = dict(w1a=w1a, b1a=b1a, w1b=w1b, b1b=b1b, bb1=bb1, bf1=bf1,
               w2a=w2a, b2a=b2a, w2b=w2b, b2b=b2b, bb2=bb2, bf2=bf2)

    # --- exact full affine fold (no activation anywhere on the
    #     variation=False, n_layers=1 path), computed in float64 ---
    f64 = lambda a: np.asarray(a, dtype=np.float64)
    M1 = f64(w1b) @ f64(w1a)                     # (T1, S)
    v1 = f64(w1b) @ f64(b1a) + f64(b1b)          # (T1,)
    W1bb = f64(bb1).T @ M1                       # (S, S)  block-1 backcast
    c1bb = f64(bb1).T @ v1                       # (S,)
    W1fc = f64(bf1).T @ M1                       # (P, S)  block-1 forecast
    c1fc = f64(bf1).T @ v1                       # (P,)
    M2 = f64(w2b) @ f64(w2a)                     # (T2, S)
    v2 = f64(w2b) @ f64(b2a) + f64(b2b)          # (T2,)
    W2 = f64(bf2).T @ M2                         # (P, S)  block-2 forecast
    c2 = f64(bf2).T @ v2                         # (P,)

    W = W1fc + W2 @ (np.eye(seq, dtype=np.float64) - W1bb)   # (P, S)
    c = c1fc + c2 - W2 @ c1bb                                # (P,)
    # Fold the forecast-base term: out = base + W@(x - base) + c
    #                                  = W@x + (1 - rowsum(W))*x[S-1] + c
    W[:, seq - 1] += 1.0 - W.sum(axis=1)

    fused = dict(w=jnp.asarray(W, jnp.float32),
                 c=jnp.asarray(c[:, None], jnp.float32))
    return raw, fused


def reference_forward(x_enc, p):
    """Pure-JAX, unfused reference of the original module's forward pass."""
    x = jnp.transpose(x_enc, (0, 2, 1))               # (B, C, S)
    base = x[:, :, -1:]
    res = x - base
    fc = base
    # block 1 (TrendBasis)
    h = res @ p["w1a"].T + p["b1a"]
    th = h @ p["w1b"].T + p["b1b"]
    res = res - th @ p["bb1"]
    fc = fc + th @ p["bf1"]
    # block 2 (SeasonalityBasis); its backcast only feeds forecast_back, unused
    h = res @ p["w2a"].T + p["b2a"]
    th = h @ p["w2b"].T + p["b2b"]
    fc = fc + th @ p["bf2"]
    return jnp.transpose(fc, (0, 2, 1))


# TODO(synk): variational path (reparameterization sampling + KL), InstanceNorm1d
# and Dropout branches are not exercised by this config (variation=False,
# batch_normalization=False, dropout_prob=0) and are omitted.

if __name__ == "__main__":
    B, C = 2, 4                 # batch, enc_in channels
    seq_len, pred_len = 16, 8   # configs.seq_len, configs.pred_len
    n_polynomials, n_harmonics = 3, 2

    key = jax.random.PRNGKey(0)
    k_params, k_x = jax.random.split(key)
    raw, fused = make_params(seq_len, pred_len, n_polynomials, n_harmonics, k_params)
    x_enc = jax.random.normal(k_x, (B, seq_len, C), dtype=jnp.float32)

    out = jax.block_until_ready(nbeats_forward(x_enc, fused["w"], fused["c"]))
    ref = jax.block_until_ready(reference_forward(x_enc, raw))

    assert out.shape == (B, pred_len, C), out.shape
    err = np.max(np.abs(np.asarray(out) - np.asarray(ref)))
    assert np.allclose(np.asarray(out), np.asarray(ref), rtol=1e-4, atol=1e-4), err
    print("KERNEL_OK")
</pallas_src>

<mosaic_0001>
module attributes {stable_mosaic.version = 11 : i64} {
  func.func @nbeats_kernel(%arg0: i32, %arg1: memref<16x8xf32, #tpu.memory_space<vmem>>, %arg2: memref<8x16xf32, #tpu.memory_space<vmem>>, %arg3: memref<8x1xf32, #tpu.memory_space<vmem>>, %arg4: memref<8x8xf32, #tpu.memory_space<vmem>>) attributes {dimension_semantics = [#tpu.dimension_semantics<parallel>], iteration_bounds = array<i64: 1>, scalar_prefetch = 0 : i64, scratch_operands = 0 : i64, tpu.core_type = #tpu.core_type<tc>, window_params = [{transform_indices = @transform_0, window_bounds = array<i64: 16, 8>}, {pipeline_mode = #tpu.pipeline_mode<synchronous>, transform_indices = @transform_1, window_bounds = array<i64: 8, 16>}, {pipeline_mode = #tpu.pipeline_mode<synchronous>, transform_indices = @transform_2, window_bounds = array<i64: 8, 1>}, {transform_indices = @transform_3, window_bounds = array<i64: 8, 8>}]} {
    %c0 = arith.constant 0 : index
    %c0_0 = arith.constant 0 : index
    %0 = vector.load %arg2[%c0, %c0_0] : memref<8x16xf32, #tpu.memory_space<vmem>>, vector<8x16xf32>
    %c0_1 = arith.constant 0 : index
    %c0_2 = arith.constant 0 : index
    %1 = vector.load %arg1[%c0_1, %c0_2] : memref<16x8xf32, #tpu.memory_space<vmem>>, vector<16x8xf32>
    %cst = arith.constant dense<0.000000e+00> : vector<8x8xf32>
    %2 = tpu.matmul %0, %1, %cst {dimension_numbers = #tpu.dot_dimension_numbers<[1], [0], [0], [1], [0, 0, 1, 1], [], []>} : vector<8x16xf32>, vector<16x8xf32>, vector<8x8xf32> -> vector<8x8xf32>
    %c0_3 = arith.constant 0 : index
    %c0_4 = arith.constant 0 : index
    %3 = vector.load %arg3[%c0_3, %c0_4] : memref<8x1xf32, #tpu.memory_space<vmem>>, vector<8x1xf32>
    %4 = vector.broadcast %3 : vector<8x1xf32> to vector<8x8xf32>
    %5 = arith.addf %2, %4 : vector<8x8xf32>
    %c0_5 = arith.constant 0 : index
    %c0_6 = arith.constant 0 : index
    %6 = vector.load %arg4[%c0_5, %c0_6] : memref<8x8xf32, #tpu.memory_space<vmem>>, vector<8x8xf32>
    tpu.vector_store %arg4[%c0_5, %c0_6], %5 {strides = array<i32>} : memref<8x8xf32, #tpu.memory_space<vmem>>, vector<8x8xf32>,
    return
  }
  func.func @transform_0(%arg0: i32) -> (i32, i32) {
    %c0_i32 = arith.constant 0 : i32
    %c0_i32_0 = arith.constant 0 : i32
    return %c0_i32, %arg0 : i32, i32
  }
  func.func @transform_1(%arg0: i32) -> (i32, i32) {
    %c0_i32 = arith.constant 0 : i32
    %c0_i32_0 = arith.constant 0 : i32
    %c0_i32_1 = arith.constant 0 : i32
    return %c0_i32, %c0_i32_0 : i32, i32
  }
  func.func @transform_2(%arg0: i32) -> (i32, i32) {
    %c0_i32 = arith.constant 0 : i32
    %c0_i32_0 = arith.constant 0 : i32
    %c0_i32_1 = arith.constant 0 : i32
    return %c0_i32, %c0_i32_0 : i32, i32
  }
  func.func @transform_3(%arg0: i32) -> (i32, i32) {
    %c0_i32 = arith.constant 0 : i32
    %c0_i32_0 = arith.constant 0 : i32
    return %c0_i32, %arg0 : i32, i32
  }
}

</mosaic_0001>

<llo_original>
// kernel: nbeats_forward.1
$region0: #{nbeats_forward.1}
  #allocation0 [shape = 'u32[]', space=smem, size = 0x4, offset = 0x4, fixed_abs, tag = 'smem constant byte address 0x4 - core index']
  #allocation1 [shape = 'u32[144,128]{1,0:T(1,128)}', space=vmem, size = 0x12000, scoped, tag = 'internal scratch']
  %s0 = inlined_call_operand.vmem [shape: f32[16,8], index: 0, kind: input, shape index: {}]
  %s1 = inlined_call_operand.vmem [shape: f32[8,16], index: 1, kind: input, shape index: {}]
  %s2 = inlined_call_operand.vmem [shape: f32[8,1], index: 2, kind: input, shape index: {}]
  %s3 = inlined_call_operand.vmem [shape: f32[8,8], index: 3, kind: output, shape index: {}]
  %s4 = sld [smem:[#allocation0]]
  $region22: #{nbeats_forward.1} parent=0
    _
  %s6 = ssub.s32 1, %s4
  %s7 = scalar_select 0, %s6, %s4
  // Predicated region
  $region2: #{nbeats_forward.1} parent=0 // pred_check
    _
  $region3: #{nbeats_forward.1} parent=0 // pred_check_branch
    %9 = sbr.rel (0) target = $region5
  $region4: #{nbeats_forward.1} parent=0 // pred_region
    _
  $region5: #{nbeats_forward.1} parent=0 // pred_fallthru
    _
  // Predicated region
  $region6: #{nbeats_forward.1} parent=0 // pred_check
    _
  $region7: #{nbeats_forward.1} parent=0 // pred_check_branch
    %11 = sbr.rel (0) target = $region9
  $region8: #{nbeats_forward.1} parent=0 // pred_region
    _
  $region9: #{nbeats_forward.1} parent=0 // pred_fallthru
    _
  // Predicated region
  $region10: #{nbeats_forward.1} parent=0 // pred_check
    _
  $region11: #{nbeats_forward.1} parent=0 // pred_check_branch
    %13 = sbr.rel (0) target = $region13
  $region12: #{nbeats_forward.1} parent=0 // pred_region
    _
  $region13: #{nbeats_forward.1} parent=0 // pred_fallthru
    _
  %v14 = vld [vmem:[%s1] sm:$0xff]
  %v15 = vld [vmem:[%s0] sm:$0xff]
  %v16 = vld [vmem:[%s0 + $0x8] sm:$0xff]
  %v17 = vld [vmem:[%s2] sm:$0xff]
  %19 = vset.pattern.permute.xlu0 0
  %20 = vperm.xlu0 %19, %v17
  %v21 = vpop.permute.xlu0 %20
  %vm23 = vcmask 130048
  %v25 = vsel %vm23, %v14, 0
  %27 = vmatprep.subr.mxu0 0.0
  %28 = vmatpush1.msra.mxu0 %v15
  %29 = vmatprep.subr.mxu0 0.0
  %30 = vmatpush1.msra.mxu0 %v16
  %31 = vmatprep.subr.mxu0 0.0
  %32 = vmatpush1.msra.mxu0 0.0
  %33 = vmatprep.subr.mxu0 0.0
  %34 = vmatpush1.msra.mxu0 0.0
  %35 = vmatprep.subr.mxu0 0.0
  %36 = vmatpush1.msra.mxu0 0.0
  %37 = vmatprep.subr.mxu0 0.0
  %38 = vmatpush1.msra.mxu0 0.0
  %39 = vmatprep.subr.mxu0 0.0
  %40 = vmatpush1.msra.mxu0 0.0
  %41 = vmatprep.subr.mxu0 0.0
  %42 = vmatpush1.msra.mxu0 0.0
  %43 = vmatprep.subr.mxu0 0.0
  %44 = vmatpush1.msra.mxu0 0.0
  %45 = vmatprep.subr.mxu0 0.0
  %46 = vmatpush1.msra.mxu0 0.0
  %47 = vmatprep.subr.mxu0 0.0
  %48 = vmatpush1.msra.mxu0 0.0
  %49 = vmatprep.subr.mxu0 0.0
  %50 = vmatpush1.msra.mxu0 0.0
  %51 = vmatprep.subr.mxu0 0.0
  %52 = vmatpush1.msra.mxu0 0.0
  %53 = vmatprep.subr.mxu0 0.0
  %54 = vmatpush1.msra.mxu0 0.0
  %55 = vmatprep.subr.mxu0 0.0
  %56 = vmatpush1.msra.mxu0 0.0
  %57 = vmatprep.subr.mxu0 0.0
  %58 = vmatpush1.msra.mxu0 0.0
  %59 = vmatprep.subr.mxu0 0.0
  %60 = vmatpush1.msra.mxu0 0.0
  %61 = vmatprep.subr.mxu0 0.0
  %62 = vmatpush1.msra.mxu0 0.0
  %63 = vmatprep.subr.mxu0 0.0
  %64 = vmatpush1.msra.mxu0 0.0
  %65 = vmatprep.subr.mxu0 0.0
  %66 = vmatpush1.msra.mxu0 0.0
  %67 = vmatprep.subr.mxu0 0.0
  %68 = vmatpush1.msra.mxu0 0.0
  %69 = vmatprep.subr.mxu0 0.0
  %70 = vmatpush1.msra.mxu0 0.0
  %71 = vmatprep.subr.mxu0 0.0
  %72 = vmatpush1.msra.mxu0 0.0
  %73 = vmatprep.subr.mxu0 0.0
  %74 = vmatpush1.msra.mxu0 0.0
  %75 = vmatprep.subr.mxu0 0.0
  %76 = vmatpush1.msra.mxu0 0.0
  %77 = vmatprep.subr.mxu0 0.0
  %78 = vmatpush1.msra.mxu0 0.0
  %79 = vmatprep.subr.mxu0 0.0
  %80 = vmatpush1.msra.mxu0 0.0
  %81 = vmatprep.subr.mxu0 0.0
  %82 = vmatpush1.msra.mxu0 0.0
  %83 = vmatprep.subr.mxu0 0.0
  %84 = vmatpush1.msra.mxu0 0.0
  %85 = vmatprep.subr.mxu0 0.0
  %86 = vmatpush1.msra.mxu0 0.0
  %87 = vmatprep.subr.mxu0 0.0
  %88 = vmatpush1.msra.mxu0 0.0
  %89 = vmatprep.subr.mxu0 0.0
  %90 = vmatpush1.msra.mxu0 0.0
  %91 = vmatprep.mubr.f32.mxu0 0.0
  %92 = vmatmul.mubr.f32.gmra.mrb[0].mxu0 %v25
  %v93 = vpop.f32.mrb[0].mxu0
  %v94 = vadd.f32 %v21, %v93
  %v95 = vpop.f32.mrb[0].mxu0
  %96 = vdwg.mxu0
  %vm97 = vcmask 64512
  %98 = vst.msk [vmem:[%s3] sm:$0xff] %vm97, %v94
  // Predicated region
  $region14: #{nbeats_forward.1} parent=0 // pred_check
    _
  $region15: #{nbeats_forward.1} parent=0 // pred_check_branch
    %100 = sbr.rel (0) target = $region17
  $region16: #{nbeats_forward.1} parent=0 // pred_region
    _
  $region17: #{nbeats_forward.1} parent=0 // pred_fallthru
    _
  // Predicated region
  $region18: #{nbeats_forward.1} parent=0 // pred_check
    _
  $region19: #{nbeats_forward.1} parent=0 // pred_check_branch
    %102 = sbr.rel (0) target = $region21
  $region20: #{nbeats_forward.1} parent=0 // pred_region
    _
  $region21: #{nbeats_forward.1} parent=0 // pred_fallthru
    _

</llo_original>
